<compile_context>
chip_gen: v7x
topology: tpu7x:2x2x1
jax: 0.10.0
libtpu: 0.0.40
codegen_flags: <defaults>
</compile_context>

<pallas_src>
import functools

import jax
import jax.numpy as jnp
from jax.experimental import pallas as pl
from jax.experimental.pallas import tpu as pltpu


# ---------------------------------------------------------------------------
# Tile planning
# ---------------------------------------------------------------------------
_X_BLOCK_BUDGET_ELEMS = 1 << 20  # ~4 MiB of f32 per x block (~8 MiB double-buffered)


def _pick_tile(dim, cap, base):
    """Largest multiple of `base` that divides `dim` and is <= cap, else full dim."""
    if dim <= cap:
        return dim
    t = (cap // base) * base
    while t >= base:
        if dim % t == 0:
            return t
        t -= base
    return dim  # fallback: full dimension (always legal, may cost more VMEM)


def _plan_tiles(B, L, H, *, l_base, h_base):
    # Up to 8 batch rows per grid step -> 8-sublane dense output stores.
    bB = next(b for b in (8, 4, 2, 1) if B % b == 0)
    tH = _pick_tile(H, cap=2048, base=h_base)           # lane dim: mult of 128 or full
    l_cap = max(_X_BLOCK_BUDGET_ELEMS // max(bB * tH, 1), l_base)
    tL = _pick_tile(L, cap=min(l_cap, 1024), base=l_base)
    return bB, tL, tH


def _compiler_params(block_bytes):
    # Default scoped VMEM is 16 MiB (v5e) / 32 MiB (v6e, v7x); only raise the
    # limit when the double-buffered input block clearly needs it, and stay
    # under v7x's 64 MiB physical VMEM.
    vmem_limit = None
    if 2 * block_bytes > 12 * 1024 * 1024:
        vmem_limit = min(4 * block_bytes + (8 << 20), 64 << 20)
    return pltpu.CompilerParams(
        dimension_semantics=("parallel", "parallel", "arbitrary"),
        vmem_limit_bytes=vmem_limit,
    )


# ---------------------------------------------------------------------------
# Kernels
# ---------------------------------------------------------------------------
def _masked_seqpool_kernel(x_ref, m_ref, o_ref, acc_ref, den_ref):
    # x_ref: (bB, tL, tH), m_ref: (bB, tL, 1), o_ref: (bB, tH)
    # acc_ref: VMEM (bB, tH) f32, den_ref: VMEM (bB, 1) f32
    l = pl.program_id(2)

    @pl.when(l == 0)
    def _():
        acc_ref[...] = jnp.zeros_like(acc_ref)
        den_ref[...] = jnp.zeros_like(den_ref)

    x = x_ref[...].astype(jnp.float32)
    m = m_ref[...].astype(jnp.float32)
    # masked_fill(mask == 0, 0) -> x * m  (mask is 0/1 float)
    acc_ref[...] += jnp.sum(x * m, axis=1)   # (bB, tH)
    den_ref[...] += jnp.sum(m, axis=1)       # (bB, 1)  == mask.float().sum(1)

    @pl.when(l == pl.num_programs(2) - 1)
    def _():
        # Single divide per output tile (off the streaming hot path).
        # All-masked rows give inf/NaN, matching the naive PyTorch formula.
        o_ref[...] = (acc_ref[...] / den_ref[...]).astype(o_ref.dtype)


def _seqmean_kernel(x_ref, o_ref, acc_ref, *, inv_len):
    # mean over axis 1 of [B, L, H] -> (B, H)
    l = pl.program_id(2)

    @pl.when(l == 0)
    def _():
        acc_ref[...] = jnp.zeros_like(acc_ref)

    acc_ref[...] += jnp.sum(x_ref[...].astype(jnp.float32), axis=1)

    @pl.when(l == pl.num_programs(2) - 1)
    def _():
        o_ref[...] = (acc_ref[...] * inv_len).astype(o_ref.dtype)


def _lastmean_kernel(x_ref, o_ref, acc_ref, *, inv_len):
    # mean over the last (lane) axis of [B, L, H] -> (B, L); no moveaxis needed.
    h = pl.program_id(2)

    @pl.when(h == 0)
    def _():
        acc_ref[...] = jnp.zeros_like(acc_ref)

    acc_ref[...] += jnp.sum(x_ref[...].astype(jnp.float32), axis=-1)

    @pl.when(h == pl.num_programs(2) - 1)
    def _():
        o_ref[...] = (acc_ref[...] * inv_len).astype(o_ref.dtype)


# ---------------------------------------------------------------------------
# pallas_call wrappers
# ---------------------------------------------------------------------------
def masked_average_pool(x, mask):
    """x: [B, L, H], mask: [B, L, 1] -> [B, H] (masked mean over L)."""
    B, L, H = x.shape
    mask3 = mask.reshape(B, L, 1).astype(jnp.float32)
    bB, tL, tH = _plan_tiles(B, L, H, l_base=8, h_base=128)
    block_bytes = bB * tL * tH * x.dtype.itemsize
    return pl.pallas_call(
        _masked_seqpool_kernel,
        out_shape=jax.ShapeDtypeStruct((B, H), x.dtype),
        grid=(B // bB, H // tH, L // tL),
        in_specs=[
            pl.BlockSpec((bB, tL, tH), lambda b, h, l: (b, l, h)),
            pl.BlockSpec((bB, tL, 1), lambda b, h, l: (b, l, 0)),
        ],
        out_specs=pl.BlockSpec((bB, tH), lambda b, h, l: (b, h)),
        scratch_shapes=[
            pltpu.VMEM((bB, tH), jnp.float32),
            pltpu.VMEM((bB, 1), jnp.float32),
        ],
        compiler_params=_compiler_params(block_bytes),
    )(x, mask3)


def _mean_over_seq(x):
    """x: [B, L, H] -> [B, H] (mean over axis 1)."""
    B, L, H = x.shape
    bB, tL, tH = _plan_tiles(B, L, H, l_base=8, h_base=128)
    block_bytes = bB * tL * tH * x.dtype.itemsize
    kern = functools.partial(_seqmean_kernel, inv_len=1.0 / L)
    return pl.pallas_call(
        kern,
        out_shape=jax.ShapeDtypeStruct((B, H), x.dtype),
        grid=(B // bB, H // tH, L // tL),
        in_specs=[pl.BlockSpec((bB, tL, tH), lambda b, h, l: (b, l, h))],
        out_specs=pl.BlockSpec((bB, tH), lambda b, h, l: (b, h)),
        scratch_shapes=[pltpu.VMEM((bB, tH), jnp.float32)],
        compiler_params=_compiler_params(block_bytes),
    )(x)


def _mean_over_last(x):
    """x: [B, L, H] -> [B, L] (mean over the last axis, reduced in-kernel)."""
    B, L, H = x.shape
    bB, tL, tH = _plan_tiles(B, L, H, l_base=128, h_base=128)
    block_bytes = bB * tL * tH * x.dtype.itemsize
    kern = functools.partial(_lastmean_kernel, inv_len=1.0 / H)
    return pl.pallas_call(
        kern,
        out_shape=jax.ShapeDtypeStruct((B, L), x.dtype),
        grid=(B // bB, L // tL, H // tH),
        in_specs=[pl.BlockSpec((bB, tL, tH), lambda b, l, h: (b, l, h))],
        out_specs=pl.BlockSpec((bB, tL), lambda b, l, h: (b, l)),
        scratch_shapes=[pltpu.VMEM((bB, tL), jnp.float32)],
        compiler_params=_compiler_params(block_bytes),
    )(x)


# ---------------------------------------------------------------------------
# Module-equivalent wrapper
# ---------------------------------------------------------------------------
class AveragePooling:
    """Pallas port of nlp_pipeline.model.layer.pooling.AveragePooling.

    Expects 3-D inputs x=[B, L, H]. No learnable parameters.
    """

    def __init__(self, dim=-1, keep_dim=False):
        self.dim = dim
        self.keep_dim = keep_dim

    def __call__(self, x, mask=None):
        assert x.ndim == 3, "this port handles 3-D inputs [B, L, H]"
        d = self.dim % 3

        if mask is None:
            if d == 1:
                out = _mean_over_seq(x)        # [B, H]
            elif d == 2:
                out = _mean_over_last(x)       # [B, L]
            else:
                raise NotImplementedError("batch-axis reduction not supported in this port")
            if self.keep_dim:
                out = jnp.expand_dims(out, d)
            return out

        # Masked path: pool over the sequence axis (docstring mandates mask [B, L, 1]).
        if d != 1:
            # TODO(synk): masked pooling over a non-sequence dim has no clean kernel here.
            raise NotImplementedError("masked AveragePooling only supported for dim=1")
        out = masked_average_pool(x, mask)     # [B, H]
        if self.keep_dim:
            out = jnp.expand_dims(out, 1)
        return out


# ---------------------------------------------------------------------------
# Demo / self-check
# ---------------------------------------------------------------------------
if __name__ == "__main__":
    key = jax.random.PRNGKey(0)
    kx, km, kx2 = jax.random.split(key, 3)

    # Aligned shapes: full 8-row batch block, lane-dense hidden.
    B, L, H = 8, 16, 256
    x = jax.random.normal(kx, (B, L, H), dtype=jnp.float32)
    mask = (jax.random.uniform(km, (B, L, 1)) > 0.4).astype(jnp.float32)
    mask = mask.at[:, 0, :].set(1.0)   # ensure at least one valid token per example

    # Masked sequence pooling (dim=1, keep_dim=False), the intended use.
    y_masked = jax.block_until_ready(AveragePooling(dim=1, keep_dim=False)(x, mask))
    ref_masked = jnp.sum(x * mask, axis=1) / jnp.sum(mask, axis=1)
    assert y_masked.shape == (B, H)
    assert jnp.allclose(y_masked, ref_masked, atol=1e-5, rtol=1e-5)

    # keep_dim variant.
    y_keep = jax.block_until_ready(AveragePooling(dim=1, keep_dim=True)(x, mask))
    assert y_keep.shape == (B, 1, H)
    assert jnp.allclose(y_keep[:, 0, :], ref_masked, atol=1e-5, rtol=1e-5)

    # Unmasked default path (dim=-1): mean over hidden, no HBM transpose.
    y_mean = jax.block_until_ready(AveragePooling()(x))
    assert y_mean.shape == (B, L)
    assert jnp.allclose(y_mean, jnp.mean(x, axis=-1), atol=1e-5, rtol=1e-5)

    # Unmasked dim=1 path.
    y_mean1 = jax.block_until_ready(AveragePooling(dim=1)(x))
    assert y_mean1.shape == (B, H)
    assert jnp.allclose(y_mean1, jnp.mean(x, axis=1), atol=1e-5, rtol=1e-5)

    # Small, non-128-aligned shapes exercise the full-dimension fallback tiles.
    B2, L2, H2 = 2, 8, 32
    x2 = jax.random.normal(kx2, (B2, L2, H2), dtype=jnp.float32)
    mask2 = jnp.ones((B2, L2, 1), dtype=jnp.float32).at[:, L2 // 2:, :].set(0.0)
    y2 = jax.block_until_ready(AveragePooling(dim=1)(x2, mask2))
    ref2 = jnp.sum(x2 * mask2, axis=1) / jnp.sum(mask2, axis=1)
    assert jnp.allclose(y2, ref2, atol=1e-5, rtol=1e-5)

    print("KERNEL_OK")
</pallas_src>

<mosaic_0001>
module attributes {stable_mosaic.version = 11 : i64} {
  func.func @_masked_seqpool_kernel(%arg0: i32, %arg1: i32, %arg2: i32, %arg3: memref<8x16x256xf32, #tpu.memory_space<vmem>>, %arg4: memref<8x16x1xf32, #tpu.memory_space<vmem>>, %arg5: memref<8x256xf32, #tpu.memory_space<vmem>>, %arg6: memref<8x256xf32, #tpu.memory_space<vmem>>, %arg7: memref<8x1xf32, #tpu.memory_space<vmem>>) attributes {dimension_semantics = [#tpu.dimension_semantics<parallel>, #tpu.dimension_semantics<parallel>, #tpu.dimension_semantics<arbitrary>], iteration_bounds = array<i64: 1, 1, 1>, scalar_prefetch = 0 : i64, scratch_operands = 2 : i64, tpu.core_type = #tpu.core_type<tc>, window_params = [{transform_indices = @transform_0, window_bounds = array<i64: 8, 16, 256>}, {transform_indices = @transform_1, window_bounds = array<i64: 8, 16, 1>}, {transform_indices = @transform_2, window_bounds = array<i64: 8, 256>}]} {
    %c0_i32 = arith.constant 0 : i32
    %0 = arith.cmpi eq, %arg2, %c0_i32 : i32
    %1 = arith.extui %0 : i1 to i32
    %c0_i32_0 = arith.constant 0 : i32
    %2 = arith.cmpi ne, %1, %c0_i32_0 : i32
    scf.if %2 {
      %cst_17 = arith.constant 0.000000e+00 : f32
      %18 = vector.broadcast %cst_17 : f32 to vector<8x256xf32>
      %c0_18 = arith.constant 0 : index
      %c0_19 = arith.constant 0 : index
      %19 = vector.load %arg6[%c0_18, %c0_19] : memref<8x256xf32, #tpu.memory_space<vmem>>, vector<8x256xf32>
      tpu.vector_store %arg6[%c0_18, %c0_19], %18 {strides = array<i32>} : memref<8x256xf32, #tpu.memory_space<vmem>>, vector<8x256xf32>,
      %cst_20 = arith.constant 0.000000e+00 : f32
      %20 = vector.broadcast %cst_20 : f32 to vector<8x1xf32>
      %c0_21 = arith.constant 0 : index
      %c0_22 = arith.constant 0 : index
      %21 = vector.load %arg7[%c0_21, %c0_22] : memref<8x1xf32, #tpu.memory_space<vmem>>, vector<8x1xf32>
      tpu.vector_store %arg7[%c0_21, %c0_22], %20 {strides = array<i32>} : memref<8x1xf32, #tpu.memory_space<vmem>>, vector<8x1xf32>,
    } else {
    }
    %c0 = arith.constant 0 : index
    %c0_1 = arith.constant 0 : index
    %c0_2 = arith.constant 0 : index
    %3 = vector.load %arg3[%c0, %c0_1, %c0_2] : memref<8x16x256xf32, #tpu.memory_space<vmem>>, vector<8x16x256xf32>
    %c0_3 = arith.constant 0 : index
    %c0_4 = arith.constant 0 : index
    %c0_5 = arith.constant 0 : index
    %4 = vector.load %arg4[%c0_3, %c0_4, %c0_5] : memref<8x16x1xf32, #tpu.memory_space<vmem>>, vector<8x16x1xf32>
    %c0_6 = arith.constant 0 : index
    %c0_7 = arith.constant 0 : index
    %5 = vector.load %arg6[%c0_6, %c0_7] : memref<8x256xf32, #tpu.memory_space<vmem>>, vector<8x256xf32>
    %6 = vector.broadcast %4 : vector<8x16x1xf32> to vector<8x16x256xf32>
    %7 = arith.mulf %3, %6 : vector<8x16x256xf32>
    %cst = arith.constant dense<0.000000e+00> : vector<8x256xf32>
    %8 = vector.multi_reduction <add>, %7, %cst [1] : vector<8x16x256xf32> to vector<8x256xf32>
    %9 = arith.addf %5, %8 : vector<8x256xf32>
    %c0_8 = arith.constant 0 : index
    %c0_9 = arith.constant 0 : index
    %10 = vector.load %arg6[%c0_8, %c0_9] : memref<8x256xf32, #tpu.memory_space<vmem>>, vector<8x256xf32>
    tpu.vector_store %arg6[%c0_8, %c0_9], %9 {strides = array<i32>} : memref<8x256xf32, #tpu.memory_space<vmem>>, vector<8x256xf32>,
    %c0_10 = arith.constant 0 : index
    %c0_11 = arith.constant 0 : index
    %11 = vector.load %arg7[%c0_10, %c0_11] : memref<8x1xf32, #tpu.memory_space<vmem>>, vector<8x1xf32>
    %cst_12 = arith.constant dense<0.000000e+00> : vector<8x1xf32>
    %12 = vector.multi_reduction <add>, %4, %cst_12 [1] : vector<8x16x1xf32> to vector<8x1xf32>
    %13 = arith.addf %11, %12 : vector<8x1xf32>
    %c0_13 = arith.constant 0 : index
    %c0_14 = arith.constant 0 : index
    %14 = vector.load %arg7[%c0_13, %c0_14] : memref<8x1xf32, #tpu.memory_space<vmem>>, vector<8x1xf32>
    tpu.vector_store %arg7[%c0_13, %c0_14], %13 {strides = array<i32>} : memref<8x1xf32, #tpu.memory_space<vmem>>, vector<8x1xf32>,
    %c0_i32_15 = arith.constant 0 : i32
    %15 = arith.cmpi eq, %arg2, %c0_i32_15 : i32
    %16 = arith.extui %15 : i1 to i32
    %c0_i32_16 = arith.constant 0 : i32
    %17 = arith.cmpi ne, %16, %c0_i32_16 : i32
    scf.if %17 {
      %c0_17 = arith.constant 0 : index
      %c0_18 = arith.constant 0 : index
      %18 = vector.load %arg6[%c0_17, %c0_18] : memref<8x256xf32, #tpu.memory_space<vmem>>, vector<8x256xf32>
      %c0_19 = arith.constant 0 : index
      %c0_20 = arith.constant 0 : index
      %19 = vector.load %arg7[%c0_19, %c0_20] : memref<8x1xf32, #tpu.memory_space<vmem>>, vector<8x1xf32>
      %20 = vector.broadcast %19 : vector<8x1xf32> to vector<8x256xf32>
      %21 = arith.divf %18, %20 : vector<8x256xf32>
      %c0_21 = arith.constant 0 : index
      %c0_22 = arith.constant 0 : index
      %22 = vector.load %arg5[%c0_21, %c0_22] : memref<8x256xf32, #tpu.memory_space<vmem>>, vector<8x256xf32>
      tpu.vector_store %arg5[%c0_21, %c0_22], %21 {strides = array<i32>} : memref<8x256xf32, #tpu.memory_space<vmem>>, vector<8x256xf32>,
    } else {
    }
    return
  }
  func.func @transform_0(%arg0: i32, %arg1: i32, %arg2: i32) -> (i32, i32, i32) {
    %c0_i32 = arith.constant 0 : i32
    return %arg0, %arg2, %arg1 : i32, i32, i32
  }
  func.func @transform_1(%arg0: i32, %arg1: i32, %arg2: i32) -> (i32, i32, i32) {
    %c0_i32 = arith.constant 0 : i32
    %c0_i32_0 = arith.constant 0 : i32
    return %arg0, %arg2, %c0_i32 : i32, i32, i32
  }
  func.func @transform_2(%arg0: i32, %arg1: i32, %arg2: i32) -> (i32, i32) {
    %c0_i32 = arith.constant 0 : i32
    return %arg0, %arg1 : i32, i32
  }
}

</mosaic_0001>

<llo_original>
// kernel: tpu_custom_call.1
$region0: #{tpu_custom_call.1}
  #allocation0 [shape = 'u32[]', space=smem, size = 0x4, offset = 0x4, fixed_abs, tag = 'smem constant byte address 0x4 - core index']
  #allocation1 [shape = 'u32[144,128]{1,0:T(1,128)}', space=vmem, size = 0x12000, scoped, tag = 'internal scratch']
  #allocation2 [shape = 'f32[8,256]{1,0:T(8,128)}', space=vmem, size = 0x2000, scoped, tag = 'scratch operand']
  #allocation3 [shape = 'f32[8,1]{1,0:T(8,128)}', space=vmem, size = 0x1000, scoped, tag = 'scratch operand']
  %s0 = inlined_call_operand.hbm [shape: f32[8,16,256], index: 0, kind: input, shape index: {}]
  %s1 = inlined_call_operand.vmem [shape: f32[8,16,1], index: 1, kind: input, shape index: {}]
  %s2 = inlined_call_operand.hbm [shape: f32[8,256], index: 2, kind: output, shape index: {}]
  %s3 = sld [smem:[#allocation0]]
  $region30: #{tpu_custom_call.1} parent=0
    _
  %s5 = ssub.s32 1, %s3
  %s6 = scalar_select 0, %s5, %s3
  $region1: #{tpu_custom_call.1} parent=0
    #allocation4 [shape = 'u8[131072]{0}', space=vmem, size = 0x20000, scoped, tag = 'input window, operand 0, single buffered']
    #allocation5 [shape = 's32[1]{0}', space=sflag, size = 0x4, scoped, tag = 'scoped memory for tpu_custom_call.1']
    #allocation6 [shape = 's32[1]{0}', space=sflag, size = 0x4, scoped, tag = 'scoped memory for tpu_custom_call.1']
    #allocation7 [shape = 'u8[8192]{0}', space=vmem, size = 0x2000, scoped, tag = 'output window, operand 0, single buffered']
    %7 = vsyncpa [#allocation5], 0
    %8 = vsyncpa [#allocation6], 0
    // Predicated region
    $region2: #{tpu_custom_call.1} parent=1 // pred_check
      _
    $region3: #{tpu_custom_call.1} parent=1 // pred_check_branch
      %10 = sbr.rel (0) target = $region5
    $region4: #{tpu_custom_call.1} parent=1 // pred_region
      %s12 = ssub.s32 4096, 4096
      %13 = vsyncadd [#allocation5], %s12
      %s14 = sshll.u32 [#allocation4], 4
      %s15 = int_to_ptr.vmem [resolvable:$true] %s14
      %20 = dma.hbm_to_vmem [thread:$0]  %s0, 4096, %s15, [#allocation5], 256, 256, 16
    $region5: #{tpu_custom_call.1} parent=1 // pred_fallthru
      _
    // Predicated region
    $region6: #{tpu_custom_call.1} parent=1 // pred_check
      _
    $region7: #{tpu_custom_call.1} parent=1 // pred_check_branch
      %22 = sbr.rel (0) target = $region9
    $region8: #{tpu_custom_call.1} parent=1 // pred_region
      _
    $region9: #{tpu_custom_call.1} parent=1 // pred_fallthru
      _
    // Predicated region
    $region10: #{tpu_custom_call.1} parent=1 // pred_check
      _
    $region11: #{tpu_custom_call.1} parent=1 // pred_check_branch
      %24 = sbr.rel (0) target = $region13
    $region12: #{tpu_custom_call.1} parent=1 // pred_region
      %25 = dma.done [#allocation5], 4096
    $region13: #{tpu_custom_call.1} parent=1 // pred_fallthru
      _
    %p26 = scmp.eq.s32.totalorder 0, 0
    // Predicated region
    $region14: #{tpu_custom_call.1} parent=1 // pred_check
      %p27 = pneg %p26
    $region15: #{tpu_custom_call.1} parent=1 // pred_check_branch
      %29 = sbr.rel (%p27) target = $region17
    $region16: #{tpu_custom_call.1} parent=1 // pred_region
      %30 = vst [vmem:[#allocation2] sm:$0xff] 0.0
      %31 = vst [vmem:[#allocation2 + $0x8] sm:$0xff] 0.0
      %vm32 = vcmask 7168
      %33 = vst.msk [vmem:[#allocation3] sm:$0xff] %vm32, 0.0
    $region17: #{tpu_custom_call.1} parent=1 // pred_fallthru
      _
    %v34 = vld [vmem:[#allocation4] sm:$0xff]
    %v35 = vld [vmem:[#allocation4 + $0x8] sm:$0xff]
    %v36 = vld [vmem:[#allocation4 + $0x10] sm:$0xff]
    %v37 = vld [vmem:[#allocation4 + $0x18] sm:$0xff]
    %v38 = vld [vmem:[#allocation4 + $0x20] sm:$0xff]
    %v39 = vld [vmem:[#allocation4 + $0x28] sm:$0xff]
    %v40 = vld [vmem:[#allocation4 + $0x30] sm:$0xff]
    %v41 = vld [vmem:[#allocation4 + $0x38] sm:$0xff]
    %v42 = vld [vmem:[#allocation4 + $0x40] sm:$0xff]
    %v43 = vld [vmem:[#allocation4 + $0x48] sm:$0xff]
    %v44 = vld [vmem:[#allocation4 + $0x50] sm:$0xff]
    %v45 = vld [vmem:[#allocation4 + $0x58] sm:$0xff]
    %v46 = vld [vmem:[#allocation4 + $0x60] sm:$0xff]
    %v47 = vld [vmem:[#allocation4 + $0x68] sm:$0xff]
    %v48 = vld [vmem:[#allocation4 + $0x70] sm:$0xff]
    %v49 = vld [vmem:[#allocation4 + $0x78] sm:$0xff]
    %v50 = vld [vmem:[#allocation4 + $0x80] sm:$0xff]
    %v51 = vld [vmem:[#allocation4 + $0x88] sm:$0xff]
    %v52 = vld [vmem:[#allocation4 + $0x90] sm:$0xff]
    %v53 = vld [vmem:[#allocation4 + $0x98] sm:$0xff]
    %v54 = vld [vmem:[#allocation4 + $0xa0] sm:$0xff]
    %v55 = vld [vmem:[#allocation4 + $0xa8] sm:$0xff]
    %v56 = vld [vmem:[#allocation4 + $0xb0] sm:$0xff]
    %v57 = vld [vmem:[#allocation4 + $0xb8] sm:$0xff]
    %v58 = vld [vmem:[#allocation4 + $0xc0] sm:$0xff]
    %v59 = vld [vmem:[#allocation4 + $0xc8] sm:$0xff]
    %v60 = vld [vmem:[#allocation4 + $0xd0] sm:$0xff]
    %v61 = vld [vmem:[#allocation4 + $0xd8] sm:$0xff]
    %v62 = vld [vmem:[#allocation4 + $0xe0] sm:$0xff]
    %v63 = vld [vmem:[#allocation4 + $0xe8] sm:$0xff]
    %v64 = vld [vmem:[#allocation4 + $0xf0] sm:$0xff]
    %v65 = vld [vmem:[#allocation4 + $0xf8] sm:$0xff]
    %v66 = vld [vmem:[%s1] sm:$0xff]
    %v67 = vld [vmem:[%s1 + $0x8] sm:$0xff]
    %v68 = vld [vmem:[%s1 + $0x10] sm:$0xff]
    %v69 = vld [vmem:[%s1 + $0x18] sm:$0xff]
    %v70 = vld [vmem:[%s1 + $0x20] sm:$0xff]
    %v71 = vld [vmem:[%s1 + $0x28] sm:$0xff]
    %v72 = vld [vmem:[%s1 + $0x30] sm:$0xff]
    %v73 = vld [vmem:[%s1 + $0x38] sm:$0xff]
    %v74 = vld [vmem:[%s1 + $0x40] sm:$0xff]
    %v75 = vld [vmem:[%s1 + $0x48] sm:$0xff]
    %v76 = vld [vmem:[%s1 + $0x50] sm:$0xff]
    %v77 = vld [vmem:[%s1 + $0x58] sm:$0xff]
    %v78 = vld [vmem:[%s1 + $0x60] sm:$0xff]
    %v79 = vld [vmem:[%s1 + $0x68] sm:$0xff]
    %v80 = vld [vmem:[%s1 + $0x70] sm:$0xff]
    %v81 = vld [vmem:[%s1 + $0x78] sm:$0xff]
    %v82 = vld [vmem:[#allocation2] sm:$0xff]
    %v83 = vld [vmem:[#allocation2 + $0x8] sm:$0xff]
    %85 = vset.pattern.permute.xlu0 0
    %86 = vperm.xlu0 %85, %v66
    %v87 = vpop.permute.xlu0 %86
    %90 = vset.pattern.permute.xlu0 0
    %91 = vperm.xlu0 %90, %v67
    %v92 = vpop.permute.xlu0 %91
    %95 = vset.pattern.permute.xlu0 0
    %96 = vperm.xlu0 %95, %v68
    %v97 = vpop.permute.xlu0 %96
    %100 = vset.pattern.permute.xlu0 0
    %101 = vperm.xlu0 %100, %v69
    %v102 = vpop.permute.xlu0 %101
    %105 = vset.pattern.permute.xlu0 0
    %106 = vperm.xlu0 %105, %v70
    %v107 = vpop.permute.xlu0 %106
    %110 = vset.pattern.permute.xlu0 0
    %111 = vperm.xlu0 %110, %v71
    %v112 = vpop.permute.xlu0 %111
    %115 = vset.pattern.permute.xlu0 0
    %116 = vperm.xlu0 %115, %v72
    %v117 = vpop.permute.xlu0 %116
    %120 = vset.pattern.permute.xlu0 0
    %121 = vperm.xlu0 %120, %v73
    %v122 = vpop.permute.xlu0 %121
    %125 = vset.pattern.permute.xlu0 0
    %126 = vperm.xlu0 %125, %v74
    %v127 = vpop.permute.xlu0 %126
    %130 = vset.pattern.permute.xlu0 0
    %131 = vperm.xlu0 %130, %v75
    %v132 = vpop.permute.xlu0 %131
    %135 = vset.pattern.permute.xlu0 0
    %136 = vperm.xlu0 %135, %v76
    %v137 = vpop.permute.xlu0 %136
    %140 = vset.pattern.permute.xlu0 0
    %141 = vperm.xlu0 %140, %v77
    %v142 = vpop.permute.xlu0 %141
    %145 = vset.pattern.permute.xlu0 0
    %146 = vperm.xlu0 %145, %v78
    %v147 = vpop.permute.xlu0 %146
    %150 = vset.pattern.permute.xlu0 0
    %151 = vperm.xlu0 %150, %v79
    %v152 = vpop.permute.xlu0 %151
    %155 = vset.pattern.permute.xlu0 0
    %156 = vperm.xlu0 %155, %v80
    %v157 = vpop.permute.xlu0 %156
    %160 = vset.pattern.permute.xlu0 0
    %161 = vperm.xlu0 %160, %v81
    %v162 = vpop.permute.xlu0 %161
    %v164 = vmul.f32 %v34, %v87
    %v165 = vmul.f32 %v35, %v87
    %v166 = vmul.f32 %v36, %v92
    %v167 = vmul.f32 %v37, %v92
    %v168 = vmul.f32 %v38, %v97
    %v169 = vmul.f32 %v39, %v97
    %v170 = vmul.f32 %v40, %v102
    %v171 = vmul.f32 %v41, %v102
    %v172 = vmul.f32 %v42, %v107
    %v173 = vmul.f32 %v43, %v107
    %v174 = vmul.f32 %v44, %v112
    %v175 = vmul.f32 %v45, %v112
    %v176 = vmul.f32 %v46, %v117
    %v177 = vmul.f32 %v47, %v117
    %v178 = vmul.f32 %v48, %v122
    %v179 = vmul.f32 %v49, %v122
    %v180 = vmul.f32 %v50, %v127
    %v181 = vmul.f32 %v51, %v127
    %v182 = vmul.f32 %v52, %v132
    %v183 = vmul.f32 %v53, %v132
    %v184 = vmul.f32 %v54, %v137
    %v185 = vmul.f32 %v55, %v137
    %v186 = vmul.f32 %v56, %v142
    %v187 = vmul.f32 %v57, %v142
    %v188 = vmul.f32 %v58, %v147
    %v189 = vmul.f32 %v59, %v147
    %v190 = vmul.f32 %v60, %v152
    %v191 = vmul.f32 %v61, %v152
    %v192 = vmul.f32 %v62, %v157
    %v193 = vmul.f32 %v63, %v157
    %v194 = vmul.f32 %v64, %v162
    %v195 = vmul.f32 %v65, %v162
    %v196 = vadd.f32 %v164, %v166
    %v197 = vrot.slane %v196, 4
    %v198 = vadd.f32 %v196, %v197
    %v199 = vrot.slane %v198, 2
    %v200 = vadd.f32 %v198, %v199
    %v201 = vrot.slane %v200, 1
    %v202 = vadd.f32 %v200, %v201
    %v203 = vadd.f32 %v165, %v167
    %v204 = vrot.slane %v203, 4
    %v205 = vadd.f32 %v203, %v204
    %v206 = vrot.slane %v205, 2
    %v207 = vadd.f32 %v205, %v206
    %v208 = vrot.slane %v207, 1
    %v209 = vadd.f32 %v207, %v208
    %v210 = vadd.f32 %v168, %v170
    %v211 = vrot.slane %v210, 4
    %v212 = vadd.f32 %v210, %v211
    %v213 = vrot.slane %v212, 2
    %v214 = vadd.f32 %v212, %v213
    %v215 = vrot.slane %v214, 1
    %v216 = vadd.f32 %v214, %v215
    %v217 = vadd.f32 %v169, %v171
    %v218 = vrot.slane %v217, 4
    %v219 = vadd.f32 %v217, %v218
    %v220 = vrot.slane %v219, 2
    %v221 = vadd.f32 %v219, %v220
    %v222 = vrot.slane %v221, 1
    %v223 = vadd.f32 %v221, %v222
    %v224 = vadd.f32 %v172, %v174
    %v225 = vrot.slane %v224, 4
    %v226 = vadd.f32 %v224, %v225
    %v227 = vrot.slane %v226, 2
    %v228 = vadd.f32 %v226, %v227
    %v229 = vrot.slane %v228, 1
    %v230 = vadd.f32 %v228, %v229
    %v231 = vadd.f32 %v173, %v175
    %v232 = vrot.slane %v231, 4
    %v233 = vadd.f32 %v231, %v232
    %v234 = vrot.slane %v233, 2
    %v235 = vadd.f32 %v233, %v234
    %v236 = vrot.slane %v235, 1
    %v237 = vadd.f32 %v235, %v236
    %v238 = vadd.f32 %v176, %v178
    %v239 = vrot.slane %v238, 4
    %v240 = vadd.f32 %v238, %v239
    %v241 = vrot.slane %v240, 2
    %v242 = vadd.f32 %v240, %v241
    %v243 = vrot.slane %v242, 1
    %v244 = vadd.f32 %v242, %v243
    %v245 = vadd.f32 %v177, %v179
    %v246 = vrot.slane %v245, 4
    %v247 = vadd.f32 %v245, %v246
    %v248 = vrot.slane %v247, 2
    %v249 = vadd.f32 %v247, %v248
    %v250 = vrot.slane %v249, 1
    %v251 = vadd.f32 %v249, %v250
    %v252 = vadd.f32 %v180, %v182
    %v253 = vrot.slane %v252, 4
    %v254 = vadd.f32 %v252, %v253
    %v255 = vrot.slane %v254, 2
    %v256 = vadd.f32 %v254, %v255
    %v257 = vrot.slane %v256, 1
    %v258 = vadd.f32 %v256, %v257
    %v259 = vadd.f32 %v181, %v183
    %v260 = vrot.slane %v259, 4
    %v261 = vadd.f32 %v259, %v260
    %v262 = vrot.slane %v261, 2
    %v263 = vadd.f32 %v261, %v262
    %v264 = vrot.slane %v263, 1
    %v265 = vadd.f32 %v263, %v264
    %v266 = vadd.f32 %v184, %v186
    %v267 = vrot.slane %v266, 4
    %v268 = vadd.f32 %v266, %v267
    %v269 = vrot.slane %v268, 2
    %v270 = vadd.f32 %v268, %v269
    %v271 = vrot.slane %v270, 1
    %v272 = vadd.f32 %v270, %v271
    %v273 = vadd.f32 %v185, %v187
    %v274 = vrot.slane %v273, 4
    %v275 = vadd.f32 %v273, %v274
    %v276 = vrot.slane %v275, 2
    %v277 = vadd.f32 %v275, %v276
    %v278 = vrot.slane %v277, 1
    %v279 = vadd.f32 %v277, %v278
    %v280 = vadd.f32 %v188, %v190
    %v281 = vrot.slane %v280, 4
    %v282 = vadd.f32 %v280, %v281
    %v283 = vrot.slane %v282, 2
    %v284 = vadd.f32 %v282, %v283
    %v285 = vrot.slane %v284, 1
    %v286 = vadd.f32 %v284, %v285
    %v287 = vadd.f32 %v189, %v191
    %v288 = vrot.slane %v287, 4
    %v289 = vadd.f32 %v287, %v288
    %v290 = vrot.slane %v289, 2
    %v291 = vadd.f32 %v289, %v290
    %v292 = vrot.slane %v291, 1
    %v293 = vadd.f32 %v291, %v292
    %v294 = vadd.f32 %v192, %v194
    %v295 = vrot.slane %v294, 4
    %v296 = vadd.f32 %v294, %v295
    %v297 = vrot.slane %v296, 2
    %v298 = vadd.f32 %v296, %v297
    %v299 = vrot.slane %v298, 1
    %v300 = vadd.f32 %v298, %v299
    %v301 = vadd.f32 %v193, %v195
    %v302 = vrot.slane %v301, 4
    %v303 = vadd.f32 %v301, %v302
    %v304 = vrot.slane %v303, 2
    %v305 = vadd.f32 %v303, %v304
    %v306 = vrot.slane %v305, 1
    %v307 = vadd.f32 %v305, %v306
    %vm324 = vcmask 1041409
    %v325 = vsel %vm324, %v216, %v202
    %vm326 = vcmask 1042434
    %v327 = vsel %vm326, %v230, %v325
    %vm328 = vcmask 1043459
    %v329 = vsel %vm328, %v244, %v327
    %vm330 = vcmask 1044484
    %v331 = vsel %vm330, %v258, %v329
    %vm332 = vcmask 1045509
    %v333 = vsel %vm332, %v272, %v331
    %vm334 = vcmask 1046534
    %v335 = vsel %vm334, %v286, %v333
    %vm336 = vcmask 1047559
    %v337 = vsel %vm336, %v300, %v335
    %v338 = vsel %vm324, %v223, %v209
    %v339 = vsel %vm326, %v237, %v338
    %v340 = vsel %vm328, %v251, %v339
    %v341 = vsel %vm330, %v265, %v340
    %v342 = vsel %vm332, %v279, %v341
    %v343 = vsel %vm334, %v293, %v342
    %v344 = vsel %vm336, %v307, %v343
    %v347 = vadd.f32 %v82, %v337
    %v348 = vadd.f32 %v83, %v344
    %349 = vst [vmem:[#allocation2] sm:$0xff] %v347
    %350 = vst [vmem:[#allocation2 + $0x8] sm:$0xff] %v348
    %v351 = vld [vmem:[#allocation3] sm:$0xff]
    %vm352 = vcmask 7168
    %v353 = vsel %vm352, %v66, 0.0
    %v354 = vsel %vm352, %v67, 0.0
    %v355 = vadd.f32 %v353, %v354
    %v356 = vrot.slane %v355, 4
    %v357 = vadd.f32 %v355, %v356
    %v358 = vrot.slane %v357, 2
    %v359 = vadd.f32 %v357, %v358
    %v360 = vrot.slane %v359, 1
    %v361 = vadd.f32 %v359, %v360
    %v362 = vsel %vm352, %v68, 0.0
    %v363 = vsel %vm352, %v69, 0.0
    %v364 = vadd.f32 %v362, %v363
    %v365 = vrot.slane %v364, 4
    %v366 = vadd.f32 %v364, %v365
    %v367 = vrot.slane %v366, 2
    %v368 = vadd.f32 %v366, %v367
    %v369 = vrot.slane %v368, 1
    %v370 = vadd.f32 %v368, %v369
    %v371 = vsel %vm352, %v70, 0.0
    %v372 = vsel %vm352, %v71, 0.0
    %v373 = vadd.f32 %v371, %v372
    %v374 = vrot.slane %v373, 4
    %v375 = vadd.f32 %v373, %v374
    %v376 = vrot.slane %v375, 2
    %v377 = vadd.f32 %v375, %v376
    %v378 = vrot.slane %v377, 1
    %v379 = vadd.f32 %v377, %v378
    %v380 = vsel %vm352, %v72, 0.0
    %v381 = vsel %vm352, %v73, 0.0
    %v382 = vadd.f32 %v380, %v381
    %v383 = vrot.slane %v382, 4
    %v384 = vadd.f32 %v382, %v383
    %v385 = vrot.slane %v384, 2
    %v386 = vadd.f32 %v384, %v385
    %v387 = vrot.slane %v386, 1
    %v388 = vadd.f32 %v386, %v387
    %v389 = vsel %vm352, %v74, 0.0
    %v390 = vsel %vm352, %v75, 0.0
    %v391 = vadd.f32 %v389, %v390
    %v392 = vrot.slane %v391, 4
    %v393 = vadd.f32 %v391, %v392
    %v394 = vrot.slane %v393, 2
    %v395 = vadd.f32 %v393, %v394
    %v396 = vrot.slane %v395, 1
    %v397 = vadd.f32 %v395, %v396
    %v398 = vsel %vm352, %v76, 0.0
    %v399 = vsel %vm352, %v77, 0.0
    %v400 = vadd.f32 %v398, %v399
    %v401 = vrot.slane %v400, 4
    %v402 = vadd.f32 %v400, %v401
    %v403 = vrot.slane %v402, 2
    %v404 = vadd.f32 %v402, %v403
    %v405 = vrot.slane %v404, 1
    %v406 = vadd.f32 %v404, %v405
    %v407 = vsel %vm352, %v78, 0.0
    %v408 = vsel %vm352, %v79, 0.0
    %v409 = vadd.f32 %v407, %v408
    %v410 = vrot.slane %v409, 4
    %v411 = vadd.f32 %v409, %v410
    %v412 = vrot.slane %v411, 2
    %v413 = vadd.f32 %v411, %v412
    %v414 = vrot.slane %v413, 1
    %v415 = vadd.f32 %v413, %v414
    %v416 = vsel %vm352, %v80, 0.0
    %v417 = vsel %vm352, %v81, 0.0
    %v418 = vadd.f32 %v416, %v417
    %v419 = vrot.slane %v418, 4
    %v420 = vadd.f32 %v418, %v419
    %v421 = vrot.slane %v420, 2
    %v422 = vadd.f32 %v420, %v421
    %v423 = vrot.slane %v422, 1
    %v424 = vadd.f32 %v422, %v423
    %v433 = vsel %vm324, %v370, %v361
    %v434 = vsel %vm326, %v379, %v433
    %v435 = vsel %vm328, %v388, %v434
    %v436 = vsel %vm330, %v397, %v435
    %v437 = vsel %vm332, %v406, %v436
    %v438 = vsel %vm334, %v415, %v437
    %v439 = vsel %vm336, %v424, %v438
    %v441 = vadd.f32 %v351, %v439
    %442 = vst.msk [vmem:[#allocation3] sm:$0xff] %vm352, %v441
    // Predicated region
    $region18: #{tpu_custom_call.1} parent=1 // pred_check
      %p443 = pneg %p26
    $region19: #{tpu_custom_call.1} parent=1 // pred_check_branch
      %445 = sbr.rel (%p443) target = $region21
    $region20: #{tpu_custom_call.1} parent=1 // pred_region
      %v446 = vld [vmem:[#allocation2] sm:$0xff]
      %v447 = vld [vmem:[#allocation2 + $0x8] sm:$0xff]
      %v448 = vld [vmem:[#allocation3] sm:$0xff]
      %450 = vset.pattern.permute.xlu0 0
      %451 = vperm.xlu0 %450, %v448
      %v452 = vpop.permute.xlu0 %451
      %v454 = vrcp.pop %v452
      %v455 = vmul.f32 %v446, %v454
      %v456 = vmul.f32 %v447, %v454
      %457 = vst [vmem:[#allocation7] sm:$0xff] %v455
      %458 = vst [vmem:[#allocation7 + $0x8] sm:$0xff] %v456
    $region21: #{tpu_custom_call.1} parent=1 // pred_fallthru
      _
    // Predicated region
    $region22: #{tpu_custom_call.1} parent=1 // pred_check
      _
    $region23: #{tpu_custom_call.1} parent=1 // pred_check_branch
      %460 = sbr.rel (0) target = $region25
    $region24: #{tpu_custom_call.1} parent=1 // pred_region
      %s462 = ssub.s32 256, 256
      %463 = vsyncadd [#allocation6], %s462
      %s465 = sshll.u32 [#allocation7], 4
      %s466 = int_to_ptr.vmem [resolvable:$true] %s465
      %468 = dma.vmem_to_hbm [thread:$0]  %s466, 256, %s2, [#allocation6]
    $region25: #{tpu_custom_call.1} parent=1 // pred_fallthru
      _
    // Predicated region
    $region26: #{tpu_custom_call.1} parent=1 // pred_check
      _
    $region27: #{tpu_custom_call.1} parent=1 // pred_check_branch
      %470 = sbr.rel (0) target = $region29
    $region28: #{tpu_custom_call.1} parent=1 // pred_region
      %471 = dma.done [#allocation6], 256
    $region29: #{tpu_custom_call.1} parent=1 // pred_fallthru
      _
    %472 = vsyncpa [#allocation5], 1
    %473 = vsyncpa [#allocation6], 1

</llo_original>
